<compile_context>
chip_gen: v5e
topology: v5e:2x2
jax: 0.10.0
libtpu: 0.0.40
codegen_flags: <defaults>
</compile_context>

<pallas_src>
import functools

import jax
import jax.numpy as jnp
from jax.experimental import pallas as pl
from jax.experimental.pallas import tpu as pltpu


def _actor_critic_kernel(x_ref, w1_ref, b1_ref, wh_ref, bh_ref,
                         h_ref, heads_ref, *, action_dim):
    # In-kernel cast of x to the compute (weight) dtype: hidden under the DMA, avoids a
    # separate wrapper-side cast pass over x in the bf16 path.
    x = x_ref[...].astype(w1_ref.dtype)

    # h = relu(x @ W1 + b1): f32 accumulation on the MXU, f32 epilogue (v5e-safe).
    h = jnp.dot(x, w1_ref[...], preferred_element_type=jnp.float32)
    h = jnp.maximum(h + b1_ref[...], 0.0)
    h_ref[...] = h.astype(h_ref.dtype)

    # Fused heads: columns [0:A) = fc_pi, column A = fc_v, rest zero-padded to 128 lanes.
    heads = jnp.dot(h.astype(wh_ref.dtype), wh_ref[...],
                    preferred_element_type=jnp.float32) + bh_ref[...]
    col = jax.lax.broadcasted_iota(jnp.int32, heads.shape, dimension=1)
    heads = jnp.where(col < action_dim, jnp.tanh(heads), heads)  # tanh only on pi cols
    heads_ref[...] = heads.astype(heads_ref.dtype)


def prepare_params(params, *, compute_dtype=jnp.float32):
    """One-time parameter prep: pack pi/v heads into a single lane-dense [H, 128k]
    weight/bias and pre-cast the matmul weights. Biases stay f32 (f32 epilogue)."""
    w1, b1, wpi, bpi, wv, bv = params
    hidden = w1.shape[1]
    action_dim = wpi.shape[1]
    head_pad = pl.cdiv(action_dim + 1, 128) * 128

    wh = jnp.zeros((hidden, head_pad), jnp.float32)
    wh = wh.at[:, :action_dim].set(wpi).at[:, action_dim].set(wv[:, 0])
    bh = jnp.zeros((1, head_pad), jnp.float32)
    bh = bh.at[:, :action_dim].set(bpi).at[:, action_dim].set(bv[0, 0])

    return (w1.astype(compute_dtype), b1, wh.astype(compute_dtype), bh)


def _round_up(v, m):
    return ((v + m - 1) // m) * m


def actor_critic_forward(x, prepped, *, action_dim, batch_tile=4096,
                         out_dtype=jnp.float32):
    """Returns (hidden, action_probs, value) matching the PyTorch module:
       hidden = relu(fc1(x)), action_probs = tanh(fc_pi(hidden)), value = fc_v(hidden)."""
    w1c, b1, whc, bh = prepped
    B, input_dim = x.shape
    hidden = w1c.shape[1]
    head_pad = whc.shape[1]
    compute_dtype = w1c.dtype

    # Sublane granularity: bf16 packs 2 rows/sublane -> tiles must be multiples of 16.
    sub = 16 if any(jnp.dtype(d).itemsize == 2
                    for d in (x.dtype, compute_dtype, out_dtype)) else 8

    # Batch-tile sizing:
    #  * as large as batch_tile allows (amortizes ~0.35 us/step overhead; HBM-bound),
    #  * >= 2 grid steps when the batch allows it (v7x: feed both TensorCores),
    #  * capped by a double-buffered VMEM budget safe under all default scoped limits.
    x_bytes = jnp.dtype(x.dtype).itemsize
    o_bytes = jnp.dtype(out_dtype).itemsize
    per_row = 2 * (input_dim * x_bytes + (hidden + head_pad) * o_bytes)  # dbl-buffered
    vmem_budget = 12 * 1024 * 1024  # under v5e's 16 MiB default scoped VMEM window
    max_rows = max(sub, (vmem_budget // per_row) // sub * sub)

    tb = min(batch_tile, max(B, sub), max_rows)
    if B > 2 * sub:  # keep at least 2 grid steps so v7x's second TC gets work
        tb = min(tb, _round_up(pl.cdiv(B, 2), sub))
    tb = _round_up(tb, sub)

    padded_B = _round_up(B, tb)
    if padded_B != B:
        x = jnp.pad(x, ((0, padded_B - B), (0, 0)))
    n_tiles = padded_B // tb

    kernel = functools.partial(_actor_critic_kernel, action_dim=action_dim)

    h_pad, heads_packed = pl.pallas_call(
        kernel,
        out_shape=(
            jax.ShapeDtypeStruct((padded_B, hidden), out_dtype),     # relu(fc1(x))
            jax.ShapeDtypeStruct((padded_B, head_pad), out_dtype),   # [tanh(pi) | v | 0.]
        ),
        grid_spec=pltpu.PrefetchScalarGridSpec(
            num_scalar_prefetch=0,
            grid=(n_tiles,),
            in_specs=[
                pl.BlockSpec((tb, input_dim), lambda i: (i, 0)),       # x tile
                pl.BlockSpec((input_dim, hidden), lambda i: (0, 0)),   # W1 (resident)
                pl.BlockSpec((1, hidden), lambda i: (0, 0)),           # b1 (resident)
                pl.BlockSpec((hidden, head_pad), lambda i: (0, 0)),    # fused head W
                pl.BlockSpec((1, head_pad), lambda i: (0, 0)),         # fused head b
            ],
            out_specs=(
                pl.BlockSpec((tb, hidden), lambda i: (i, 0)),
                pl.BlockSpec((tb, head_pad), lambda i: (i, 0)),
            ),
        ),
        compiler_params=pltpu.CompilerParams(
            dimension_semantics=("parallel",),   # batch axis -> both TCs on v7x
        ),
    )(x, w1c, b1, whc, bh)

    # Only pay the row-slice pass when the batch was actually padded.  (Consumers that
    # can read the packed heads buffer directly should slice pi/v at the consumer.)
    if padded_B != B:
        h_pad = h_pad[:B]
        heads_packed = heads_packed[:B]
    pi = heads_packed[:, :action_dim]
    v = heads_packed[:, action_dim:action_dim + 1]
    return h_pad, pi, v


def init_params(key, input_dim, action_dim, hidden_size=128):
    """Deterministic synthetic init (shapes match the nn.Linear layers in ActorCritic)."""
    k1, k2, k3, k4, k5, k6 = jax.random.split(key, 6)
    s1 = 1.0 / jnp.sqrt(input_dim)
    s2 = 1.0 / jnp.sqrt(hidden_size)
    w1 = jax.random.uniform(k1, (input_dim, hidden_size), jnp.float32, -s1, s1)
    b1 = jax.random.uniform(k2, (1, hidden_size), jnp.float32, -s1, s1)
    wpi = jax.random.uniform(k3, (hidden_size, action_dim), jnp.float32, -s2, s2)
    bpi = jax.random.uniform(k4, (1, action_dim), jnp.float32, -s2, s2)
    wv = jax.random.uniform(k5, (hidden_size, 1), jnp.float32, -s2, s2)
    bv = jax.random.uniform(k6, (1, 1), jnp.float32, -s2, s2)
    return w1, b1, wpi, bpi, wv, bv


if __name__ == "__main__":
    key = jax.random.PRNGKey(0)
    # Small shapes: B=24 exercises batch padding + a 2-step grid; hidden=128 matches module default.
    B, input_dim, action_dim, hidden_size = 24, 32, 8, 128

    kx, kp = jax.random.split(key)
    x = jax.random.normal(kx, (B, input_dim), jnp.float32)
    params = init_params(kp, input_dim, action_dim, hidden_size)

    # Pure-JAX reference.
    w1, b1, wpi, bpi, wv, bv = params
    h_ref = jnp.maximum(x @ w1 + b1, 0.0)
    pi_ref = jnp.tanh(h_ref @ wpi + bpi)
    v_ref = h_ref @ wv + bv

    # f32 path.
    prepped32 = prepare_params(params)
    fwd = jax.jit(functools.partial(actor_critic_forward, action_dim=action_dim))
    h, pi, v = jax.block_until_ready(fwd(x, prepped32))
    assert h.shape == (B, hidden_size) and pi.shape == (B, action_dim) and v.shape == (B, 1)
    assert jnp.allclose(h, h_ref, atol=1e-5)
    assert jnp.allclose(pi, pi_ref, atol=1e-5)
    assert jnp.allclose(v, v_ref, atol=1e-5)

    # bf16 matmul inputs + bf16 outputs: halves the dominant HBM traffic; x cast in-kernel,
    # f32 MXU accumulation + f32 relu/tanh epilogue kept inside the kernel.
    prepped16 = prepare_params(params, compute_dtype=jnp.bfloat16)
    fwd16 = jax.jit(functools.partial(actor_critic_forward, action_dim=action_dim,
                                      out_dtype=jnp.bfloat16))
    h16, pi16, v16 = jax.block_until_ready(fwd16(x, prepped16))
    assert jnp.allclose(h16.astype(jnp.float32), h_ref, atol=1.5e-1)
    assert jnp.allclose(pi16.astype(jnp.float32), pi_ref, atol=1.5e-1)
    assert jnp.allclose(v16.astype(jnp.float32), v_ref, atol=1.5e-1)

    print("KERNEL_OK")
</pallas_src>

<mosaic_0001>
module attributes {stable_mosaic.version = 11 : i64} {
  func.func @_actor_critic_kernel(%arg0: i32, %arg1: memref<16x32xf32, #tpu.memory_space<vmem>>, %arg2: memref<32x128xf32, #tpu.memory_space<vmem>>, %arg3: memref<1x128xf32, #tpu.memory_space<vmem>>, %arg4: memref<128x128xf32, #tpu.memory_space<vmem>>, %arg5: memref<1x128xf32, #tpu.memory_space<vmem>>, %arg6: memref<16x128xf32, #tpu.memory_space<vmem>>, %arg7: memref<16x128xf32, #tpu.memory_space<vmem>>) attributes {dimension_semantics = [#tpu.dimension_semantics<parallel>], iteration_bounds = array<i64: 2>, scalar_prefetch = 0 : i64, scratch_operands = 0 : i64, tpu.core_type = #tpu.core_type<tc>, window_params = [{transform_indices = @transform_0, window_bounds = array<i64: 16, 32>}, {pipeline_mode = #tpu.pipeline_mode<synchronous>, transform_indices = @transform_1, window_bounds = array<i64: 32, 128>}, {pipeline_mode = #tpu.pipeline_mode<synchronous>, transform_indices = @transform_2, window_bounds = array<i64: 1, 128>}, {pipeline_mode = #tpu.pipeline_mode<synchronous>, transform_indices = @transform_3, window_bounds = array<i64: 128, 128>}, {pipeline_mode = #tpu.pipeline_mode<synchronous>, transform_indices = @transform_4, window_bounds = array<i64: 1, 128>}, {transform_indices = @transform_5, window_bounds = array<i64: 16, 128>}, {transform_indices = @transform_6, window_bounds = array<i64: 16, 128>}]} {
    %c0 = arith.constant 0 : index
    %c0_0 = arith.constant 0 : index
    %0 = vector.load %arg1[%c0, %c0_0] : memref<16x32xf32, #tpu.memory_space<vmem>>, vector<16x32xf32>
    %c0_1 = arith.constant 0 : index
    %c0_2 = arith.constant 0 : index
    %1 = vector.load %arg2[%c0_1, %c0_2] : memref<32x128xf32, #tpu.memory_space<vmem>>, vector<32x128xf32>
    %cst = arith.constant dense<0.000000e+00> : vector<16x128xf32>
    %2 = tpu.matmul %0, %1, %cst {dimension_numbers = #tpu.dot_dimension_numbers<[1], [0], [0], [1], [0, 0, 1, 1], [], []>} : vector<16x32xf32>, vector<32x128xf32>, vector<16x128xf32> -> vector<16x128xf32>
    %c0_3 = arith.constant 0 : index
    %c0_4 = arith.constant 0 : index
    %3 = vector.load %arg3[%c0_3, %c0_4] : memref<1x128xf32, #tpu.memory_space<vmem>>, vector<1x128xf32>
    %4 = vector.broadcast %3 : vector<1x128xf32> to vector<16x128xf32>
    %5 = arith.addf %2, %4 : vector<16x128xf32>
    %cst_5 = arith.constant 0.000000e+00 : f32
    %6 = vector.broadcast %cst_5 : f32 to vector<16x128xf32>
    %7 = arith.maximumf %5, %6 : vector<16x128xf32>
    %c0_6 = arith.constant 0 : index
    %c0_7 = arith.constant 0 : index
    %8 = vector.load %arg6[%c0_6, %c0_7] : memref<16x128xf32, #tpu.memory_space<vmem>>, vector<16x128xf32>
    tpu.vector_store %arg6[%c0_6, %c0_7], %7 {strides = array<i32>} : memref<16x128xf32, #tpu.memory_space<vmem>>, vector<16x128xf32>,
    %c0_8 = arith.constant 0 : index
    %c0_9 = arith.constant 0 : index
    %9 = vector.load %arg4[%c0_8, %c0_9] : memref<128x128xf32, #tpu.memory_space<vmem>>, vector<128x128xf32>
    %cst_10 = arith.constant dense<0.000000e+00> : vector<16x128xf32>
    %10 = tpu.matmul %7, %9, %cst_10 {dimension_numbers = #tpu.dot_dimension_numbers<[1], [0], [0], [1], [0, 0, 1, 1], [], []>} : vector<16x128xf32>, vector<128x128xf32>, vector<16x128xf32> -> vector<16x128xf32>
    %c0_11 = arith.constant 0 : index
    %c0_12 = arith.constant 0 : index
    %11 = vector.load %arg5[%c0_11, %c0_12] : memref<1x128xf32, #tpu.memory_space<vmem>>, vector<1x128xf32>
    %12 = vector.broadcast %11 : vector<1x128xf32> to vector<16x128xf32>
    %13 = arith.addf %10, %12 : vector<16x128xf32>
    %14 = tpu.iota {dimensions = array<i32: 1>} : vector<16x128xi32>
    %c8_i32 = arith.constant 8 : i32
    %15 = vector.broadcast %c8_i32 : i32 to vector<16x128xi32>
    %16 = arith.cmpi slt, %14, %15 : vector<16x128xi32>
    %17 = math.tanh %13 : vector<16x128xf32>
    %18 = arith.select %16, %17, %13 : vector<16x128xi1>, vector<16x128xf32>
    %c0_13 = arith.constant 0 : index
    %c0_14 = arith.constant 0 : index
    %19 = vector.load %arg7[%c0_13, %c0_14] : memref<16x128xf32, #tpu.memory_space<vmem>>, vector<16x128xf32>
    tpu.vector_store %arg7[%c0_13, %c0_14], %18 {strides = array<i32>} : memref<16x128xf32, #tpu.memory_space<vmem>>, vector<16x128xf32>,
    return
  }
  func.func @transform_0(%arg0: i32) -> (i32, i32) {
    %c0_i32 = arith.constant 0 : i32
    %c0_i32_0 = arith.constant 0 : i32
    return %arg0, %c0_i32 : i32, i32
  }
  func.func @transform_1(%arg0: i32) -> (i32, i32) {
    %c0_i32 = arith.constant 0 : i32
    %c0_i32_0 = arith.constant 0 : i32
    %c0_i32_1 = arith.constant 0 : i32
    return %c0_i32, %c0_i32_0 : i32, i32
  }
  func.func @transform_2(%arg0: i32) -> (i32, i32) {
    %c0_i32 = arith.constant 0 : i32
    %c0_i32_0 = arith.constant 0 : i32
    %c0_i32_1 = arith.constant 0 : i32
    return %c0_i32, %c0_i32_0 : i32, i32
  }
  func.func @transform_3(%arg0: i32) -> (i32, i32) {
    %c0_i32 = arith.constant 0 : i32
    %c0_i32_0 = arith.constant 0 : i32
    %c0_i32_1 = arith.constant 0 : i32
    return %c0_i32, %c0_i32_0 : i32, i32
  }
  func.func @transform_4(%arg0: i32) -> (i32, i32) {
    %c0_i32 = arith.constant 0 : i32
    %c0_i32_0 = arith.constant 0 : i32
    %c0_i32_1 = arith.constant 0 : i32
    return %c0_i32, %c0_i32_0 : i32, i32
  }
  func.func @transform_5(%arg0: i32) -> (i32, i32) {
    %c0_i32 = arith.constant 0 : i32
    %c0_i32_0 = arith.constant 0 : i32
    return %arg0, %c0_i32 : i32, i32
  }
  func.func @transform_6(%arg0: i32) -> (i32, i32) {
    %c0_i32 = arith.constant 0 : i32
    %c0_i32_0 = arith.constant 0 : i32
    return %arg0, %c0_i32 : i32, i32
  }
}

</mosaic_0001>

<llo_original>
// kernel: actor_critic_forward.1
$region0: #{actor_critic_forward.1}
  #allocation0 [shape = 'u32[]', space=smem, size = 0x4, offset = 0x4, fixed_abs, tag = 'smem constant byte address 0x4 - core index']
  #allocation1 [shape = 'u32[72,128]{1,0:T(1,128)}', space=vmem, size = 0x9000, scoped, tag = 'internal scratch']
  %s0 = inlined_call_operand.vmem [shape: f32[32,32], index: 0, kind: input, shape index: {}]
  %s1 = inlined_call_operand.vmem [shape: f32[32,128], index: 1, kind: input, shape index: {}]
  %s2 = inlined_call_operand.vmem [shape: f32[1,128], index: 2, kind: input, shape index: {}]
  %s3 = inlined_call_operand.hbm [shape: f32[128,128], index: 3, kind: input, shape index: {}]
  %s4 = inlined_call_operand.vmem [shape: f32[1,128], index: 4, kind: input, shape index: {}]
  %s5 = inlined_call_operand.vmem [shape: f32[32,128], index: 5, kind: output, shape index: {0}]
  %s6 = inlined_call_operand.vmem [shape: f32[32,128], index: 6, kind: output, shape index: {1}]
  %7 = xla_tuple %s5, %s6
  %s8 = sld [smem:[#allocation0]]
  $region65: #{actor_critic_forward.1} parent=0
    _
  %s10 = ssub.s32 1, %s8
  %s11 = scalar_select 0, %s10, %s8
  $region1: #{actor_critic_forward.1} parent=0
    #allocation2 [shape = 'u8[65536]{0}', space=vmem, size = 0x10000, scoped, tag = 'input window, operand 3, single buffered']
    #allocation3 [shape = 's32[2]{0}', space=sflag, size = 0x8, scoped, tag = 'scoped memory for actor_critic_forward.1']
    %12 = vsyncpa [#allocation3], 0
    loop: start=0, step=1, limit=4
    $region2: #{actor_critic_forward.1} parent=1 // loop_pre_header
      _
    $region3: #{actor_critic_forward.1} parent=1 // loop_header
      %s14 = sphi 0, %s18
      %p15 = scmp.ge.s32.totalorder %s14, 4
      %s24 = sphi 0, %s26
      %s27 = sphi 0, %s24
      %s28 = sphi 0, %s27
      %s44 = sphi 0, %s28
      %s48 = sphi 0, %s48
      %s50 = sphi 0, %s48
      %s51 = sphi 0, %s50
      %s65 = sphi 0, %s51
      %s69 = sphi 0, %s69
      %s71 = sphi 0, %s69
      %s72 = sphi 0, %s71
      %s86 = sphi 0, %s72
      %s90 = sphi 0, %s90
      %s92 = sphi 0, %s90
      %s93 = sphi 0, %s92
      %s107 = sphi 0, %s93
      %s111 = sphi 0, %s111
      %s113 = sphi 0, %s111
      %s114 = sphi 0, %s113
      %s128 = sphi 0, %s114
      %s134 = sphi 0, %s136
      %s137 = sphi 0, %s134
      %s138 = sphi 0, %s137
      %s154 = sphi 0, %s138
      %s160 = sphi 0, %s162
      %s163 = sphi 0, %s160
      %s164 = sphi 0, %s163
      %s180 = sphi 0, %s164
    $region4: #{actor_critic_forward.1} parent=1 // loop_header_branch
      %17 = sbr.rel (%p15) target = $region8
    $region5: #{actor_critic_forward.1} parent=1 // loop_body
      %s19 = ssub.s32 %s14, 1
      %s20 = ssub.s32 %s14, 2
      %s21 = sadd.s32 %s14, 1
      %s22 = ssub.s32 %s14, %s21
      %p23 = scmp.eq.s32.totalorder %s22, 0
      %s25 = sadd.s32 %s24, 1
      %s26 = scalar_select %p23, %s24, %s25
      %p29 = pneg %p23
      %p30 = scmp.eq.s32.totalorder %s14, 1
      %p31 = por %p29, %p30
      %p32 = scmp.ne.s32.totalorder %s24, %s27
      %p33 = scmp.eq.s32.totalorder %s14, 0
      %p34 = por %p32, %p33
      %p35 = scmp.ne.s32.totalorder %s24, %s27
      %p36 = scmp.eq.s32.totalorder %s19, 1
      %p37 = por %p35, %p36
      %p38 = scmp.ne.s32.totalorder %s27, %s28
      %p39 = scmp.eq.s32.totalorder %s19, 0
      %p40 = por %p38, %p39
      %p41 = scmp.ne.s32.totalorder %s27, %s28
      %p42 = scmp.eq.s32.totalorder %s20, 1
      %p43 = por %p41, %p42
      %p45 = scmp.ne.s32.totalorder %s28, %s44
      %p46 = scmp.eq.s32.totalorder %s20, 0
      %p47 = por %p45, %p46
      %s49 = sadd.s32 %s48, 1
      %p52 = scmp.eq.s32.totalorder %s14, 1
      %p53 = scmp.ne.s32.totalorder %s48, %s50
      %p54 = scmp.eq.s32.totalorder %s14, 0
      %p55 = por %p53, %p54
      %p56 = scmp.ne.s32.totalorder %s48, %s50
      %p57 = scmp.eq.s32.totalorder %s19, 1
      %p58 = por %p56, %p57
      %p59 = scmp.ne.s32.totalorder %s50, %s51
      %p60 = scmp.eq.s32.totalorder %s19, 0
      %p61 = por %p59, %p60
      %p62 = scmp.ne.s32.totalorder %s50, %s51
      %p63 = scmp.eq.s32.totalorder %s20, 1
      %p64 = por %p62, %p63
      %p66 = scmp.ne.s32.totalorder %s51, %s65
      %p67 = scmp.eq.s32.totalorder %s20, 0
      %p68 = por %p66, %p67
      %s70 = sadd.s32 %s69, 1
      %p73 = scmp.eq.s32.totalorder %s14, 1
      %p74 = scmp.ne.s32.totalorder %s69, %s71
      %p75 = scmp.eq.s32.totalorder %s14, 0
      %p76 = por %p74, %p75
      %p77 = scmp.ne.s32.totalorder %s69, %s71
      %p78 = scmp.eq.s32.totalorder %s19, 1
      %p79 = por %p77, %p78
      %p80 = scmp.ne.s32.totalorder %s71, %s72
      %p81 = scmp.eq.s32.totalorder %s19, 0
      %p82 = por %p80, %p81
      %p83 = scmp.ne.s32.totalorder %s71, %s72
      %p84 = scmp.eq.s32.totalorder %s20, 1
      %p85 = por %p83, %p84
      %p87 = scmp.ne.s32.totalorder %s72, %s86
      %p88 = scmp.eq.s32.totalorder %s20, 0
      %p89 = por %p87, %p88
      %s91 = sadd.s32 %s90, 1
      %p94 = scmp.eq.s32.totalorder %s14, 1
      %p95 = scmp.ne.s32.totalorder %s90, %s92
      %p96 = scmp.eq.s32.totalorder %s14, 0
      %p97 = por %p95, %p96
      %p98 = scmp.ne.s32.totalorder %s90, %s92
      %p99 = scmp.eq.s32.totalorder %s19, 1
      %p100 = por %p98, %p99
      %p101 = scmp.ne.s32.totalorder %s92, %s93
      %p102 = scmp.eq.s32.totalorder %s19, 0
      %p103 = por %p101, %p102
      %p104 = scmp.ne.s32.totalorder %s92, %s93
      %p105 = scmp.eq.s32.totalorder %s20, 1
      %p106 = por %p104, %p105
      %p108 = scmp.ne.s32.totalorder %s93, %s107
      %p109 = scmp.eq.s32.totalorder %s20, 0
      %p110 = por %p108, %p109
      %s112 = sadd.s32 %s111, 1
      %p115 = scmp.eq.s32.totalorder %s14, 1
      %p116 = scmp.ne.s32.totalorder %s111, %s113
      %p117 = scmp.eq.s32.totalorder %s14, 0
      %p118 = por %p116, %p117
      %p119 = scmp.ne.s32.totalorder %s111, %s113
      %p120 = scmp.eq.s32.totalorder %s19, 1
      %p121 = por %p119, %p120
      %p122 = scmp.ne.s32.totalorder %s113, %s114
      %p123 = scmp.eq.s32.totalorder %s19, 0
      %p124 = por %p122, %p123
      %p125 = scmp.ne.s32.totalorder %s113, %s114
      %p126 = scmp.eq.s32.totalorder %s20, 1
      %p127 = por %p125, %p126
      %p129 = scmp.ne.s32.totalorder %s114, %s128
      %p130 = scmp.eq.s32.totalorder %s20, 0
      %p131 = por %p129, %p130
      %s132 = ssub.s32 %s14, %s21
      %p133 = scmp.eq.s32.totalorder %s132, 0
      %s135 = sadd.s32 %s134, 1
      %s136 = scalar_select %p133, %s134, %s135
      %p139 = pneg %p133
      %p140 = scmp.eq.s32.totalorder %s14, 1
      %p141 = por %p139, %p140
      %p142 = scmp.ne.s32.totalorder %s134, %s137
      %p143 = scmp.eq.s32.totalorder %s14, 0
      %p144 = por %p142, %p143
      %p145 = scmp.ne.s32.totalorder %s134, %s137
      %p146 = scmp.eq.s32.totalorder %s19, 1
      %p147 = por %p145, %p146
      %p148 = scmp.ne.s32.totalorder %s137, %s138
      %p149 = scmp.eq.s32.totalorder %s19, 0
      %p150 = por %p148, %p149
      %p151 = scmp.ne.s32.totalorder %s137, %s138
      %p152 = scmp.eq.s32.totalorder %s20, 1
      %p153 = por %p151, %p152
      %p155 = scmp.ne.s32.totalorder %s138, %s154
      %p156 = scmp.eq.s32.totalorder %s20, 0
      %p157 = por %p155, %p156
      %s158 = ssub.s32 %s14, %s21
      %p159 = scmp.eq.s32.totalorder %s158, 0
      %s161 = sadd.s32 %s160, 1
      %s162 = scalar_select %p159, %s160, %s161
      %p165 = pneg %p159
      %p166 = scmp.eq.s32.totalorder %s14, 1
      %p167 = por %p165, %p166
      %p168 = scmp.ne.s32.totalorder %s160, %s163
      %p169 = scmp.eq.s32.totalorder %s14, 0
      %p170 = por %p168, %p169
      %p171 = scmp.ne.s32.totalorder %s160, %s163
      %p172 = scmp.eq.s32.totalorder %s19, 1
      %p173 = por %p171, %p172
      %p174 = scmp.ne.s32.totalorder %s163, %s164
      %p175 = scmp.eq.s32.totalorder %s19, 0
      %p176 = por %p174, %p175
      %p177 = scmp.ne.s32.totalorder %s163, %s164
      %p178 = scmp.eq.s32.totalorder %s20, 1
      %p179 = por %p177, %p178
      %p181 = scmp.ne.s32.totalorder %s164, %s180
      %p182 = scmp.eq.s32.totalorder %s20, 0
      %p183 = por %p181, %p182
      %p184 = scmp.le.s32.totalorder 1, %s14
      %p185 = scmp.lt.s32.totalorder %s14, 3
      %p186 = pnand %p184, %p185
      %p187 = pneg %p186
      // Predicated region
      $region9: #{actor_critic_forward.1} parent=5 // pred_check
        _
      $region10: #{actor_critic_forward.1} parent=5 // pred_check_branch
        %189 = sbr.rel (%p186) target = $region12
      $region11: #{actor_critic_forward.1} parent=5 // pred_region
        %s190 = ssub.s32 %s14, 1
        // Predicated region
        $region13: #{actor_critic_forward.1} parent=11 // pred_check
          %p191 = pneg %p61
        $region14: #{actor_critic_forward.1} parent=11 // pred_check_branch
          %193 = sbr.rel (%p191) target = $region16
        $region15: #{actor_critic_forward.1} parent=11 // pred_region
          _
        $region16: #{actor_critic_forward.1} parent=11 // pred_fallthru
          _
        // Predicated region
        $region17: #{actor_critic_forward.1} parent=11 // pred_check
          %p194 = pneg %p82
        $region18: #{actor_critic_forward.1} parent=11 // pred_check_branch
          %196 = sbr.rel (%p194) target = $region20
        $region19: #{actor_critic_forward.1} parent=11 // pred_region
          _
        $region20: #{actor_critic_forward.1} parent=11 // pred_fallthru
          _
        // Predicated region
        $region21: #{actor_critic_forward.1} parent=11 // pred_check
          %p197 = pneg %p103
        $region22: #{actor_critic_forward.1} parent=11 // pred_check_branch
          %199 = sbr.rel (%p197) target = $region24
        $region23: #{actor_critic_forward.1} parent=11 // pred_region
          %201 = vsyncadd [#allocation3], 0
          %s202 = sshll.u32 %s3, 4
          %s203 = int_to_ptr.hbm [resolvable:$true] %s202
          %s204 = sshll.u32 [#allocation2], 4
          %s205 = int_to_ptr.vmem [resolvable:$true] %s204
          %210 = dma.hbm_to_vmem [thread:$0]  %s203, 2048, %s205, [#allocation3], 128, 128, 8
        $region24: #{actor_critic_forward.1} parent=11 // pred_fallthru
          _
        // Predicated region
        $region25: #{actor_critic_forward.1} parent=11 // pred_check
          %p211 = pneg %p124
        $region26: #{actor_critic_forward.1} parent=11 // pred_check_branch
          %213 = sbr.rel (%p211) target = $region28
        $region27: #{actor_critic_forward.1} parent=11 // pred_region
          _
        $region28: #{actor_critic_forward.1} parent=11 // pred_fallthru
          _
      $region12: #{actor_critic_forward.1} parent=5 // pred_fallthru
        _
      %p214 = scmp.lt.s32.totalorder %s14, 2
      // Predicated region
      $region29: #{actor_critic_forward.1} parent=5 // pred_check
        %p215 = pneg %p214
      $region30: #{actor_critic_forward.1} parent=5 // pred_check_branch
        %217 = sbr.rel (%p215) target = $region32
      $region31: #{actor_critic_forward.1} parent=5 // pred_region
        // Predicated region
        $region33: #{actor_critic_forward.1} parent=31 // pred_check
          %p218 = pneg %p34
        $region34: #{actor_critic_forward.1} parent=31 // pred_check_branch
          %220 = sbr.rel (%p218) target = $region36
        $region35: #{actor_critic_forward.1} parent=31 // pred_region
          %s221 = smul.u32 2, %s14
          %p222 = scmp.lt.s32.totalorder %s221, 3
          %s223 = scalar_select %p222, %s221, 3
          %s224 = smul.addr %s223, 8
          %s225 = scalar_lea.vmem %s0, %s224
          %s226 = smul.u32 2, %s14
        $region36: #{actor_critic_forward.1} parent=31 // pred_fallthru
          _
      $region32: #{actor_critic_forward.1} parent=5 // pred_fallthru
        _
      %p227 = scmp.le.s32.totalorder 1, %s14
      %p228 = scmp.lt.s32.totalorder %s14, 3
      %p229 = pnand %p227, %p228
      %p230 = pneg %p229
      // Predicated region
      $region37: #{actor_critic_forward.1} parent=5 // pred_check
        _
      $region38: #{actor_critic_forward.1} parent=5 // pred_check_branch
        %232 = sbr.rel (%p229) target = $region40
      $region39: #{actor_critic_forward.1} parent=5 // pred_region
        %s233 = ssub.s32 %s14, 1
        // Predicated region
        $region41: #{actor_critic_forward.1} parent=39 // pred_check
          %p234 = pneg %p103
        $region42: #{actor_critic_forward.1} parent=39 // pred_check_branch
          %236 = sbr.rel (%p234) target = $region44
        $region43: #{actor_critic_forward.1} parent=39 // pred_region
          %238 = dma.done [#allocation3], 2048
        $region44: #{actor_critic_forward.1} parent=39 // pred_fallthru
          _
        %s239 = smul.u32 2, %s19
        %p240 = scmp.lt.s32.totalorder %s239, 3
        %s241 = scalar_select %p240, %s239, 3
        %s242 = smul.addr %s241, 8
        %s243 = scalar_lea.vmem %s0, %s242
        %p244 = pneg %p40
        %p245 = pneg %p37
        %p246 = pneg %p61
        %p247 = pneg %p58
        %p248 = pneg %p82
        %p249 = pneg %p79
        %p250 = pneg %p103
        %p251 = pneg %p100
        %p252 = pneg %p124
        %p253 = pneg %p121
        %p254 = pneg %p150
        %p255 = pneg %p147
        %s256 = smul.u32 2, %s19
        %p257 = scmp.lt.s32.totalorder %s256, 3
        %s258 = scalar_select %p257, %s256, 3
        %s259 = smul.addr %s258, 8
        %s260 = scalar_lea.vmem %s5, %s259
        %p261 = pneg %p176
        %p262 = pneg %p173
        %s263 = smul.u32 2, %s19
        %p264 = scmp.lt.s32.totalorder %s263, 3
        %s265 = scalar_select %p264, %s263, 3
        %s266 = smul.addr %s265, 8
        %s267 = scalar_lea.vmem %s6, %s266
        %s268 = smul.u32 2, %s19
        %p269 = scmp.lt.s32.totalorder %s268, 3
        %s270 = scalar_select %p269, %s268, 3
        %s271 = smul.addr %s270, 8
        %s272 = scalar_lea.vmem %s0, %s271
        %s273 = smul.u32 2, %s19
        %s274 = smul.u32 2, %s19
        %p275 = scmp.lt.s32.totalorder %s274, 3
        %s276 = scalar_select %p275, %s274, 3
        %s277 = smul.addr %s276, 8
        %s278 = scalar_lea.vmem %s5, %s277
        %s279 = smul.u32 2, %s19
        %s280 = smul.u32 2, %s19
        %p281 = scmp.lt.s32.totalorder %s280, 3
        %s282 = scalar_select %p281, %s280, 3
        %s283 = smul.addr %s282, 8
        %s284 = scalar_lea.vmem %s6, %s283
        %s285 = smul.u32 2, %s19
        %v286 = vld [vmem:[%s272] sm:$0xff]
        %v287 = vld [vmem:[%s272 + $0x8] sm:$0xff]
        %v288 = vld [vmem:[%s1] sm:$0xff]
        %v289 = vld [vmem:[%s1 + $0x8] sm:$0xff]
        %v290 = vld [vmem:[%s1 + $0x10] sm:$0xff]
        %v291 = vld [vmem:[%s1 + $0x18] sm:$0xff]
        %v292 = vld [vmem:[%s2] sm:$0x1]
        %v294 = vperm.slane %v292, 0
        %vm296 = vcmask 261120
        %v298 = vsel %vm296, %v286, 0
        %v301 = vsel %vm296, %v287, 0
        %303 = vmatpush.msra.mxu0 0.0
        %304 = vmatpush.msra.mxu0 0.0
        %305 = vmatpush.msra.mxu0 0.0
        %306 = vmatpush.msra.mxu0 0.0
        %307 = vmatpush.msra.mxu0 0.0
        %308 = vmatpush.msra.mxu0 0.0
        %309 = vmatpush.msra.mxu0 0.0
        %310 = vmatpush.msra.mxu0 0.0
        %311 = vmatpush.msra.mxu0 0.0
        %312 = vmatpush.msra.mxu0 0.0
        %313 = vmatpush.msra.mxu0 0.0
        %314 = vmatpush.msra.mxu0 0.0
        %315 = vmatpush.msra.mxu0 %v291
        %316 = vmatpush.msra.mxu0 %v290
        %317 = vmatpush.msra.mxu0 %v289
        %318 = vmatpush.msra.mxu0 %v288
        %319 = vmatmul.f32.gmra.mxu0 %v298
        %v320 = vpop.f32.mrf.mxu0
        %v321 = vadd.f32 %v294, %v320
        %322 = vmatmul.f32.gmra.mxu0 %v301
        %v323 = vpop.f32.mrf.mxu0
        %v324 = vadd.f32 %v294, %v323
        %325 = vdwg.mxu0
        %v326 = vmax.f32 %v321, 0.0
        %v327 = vmax.f32 %v324, 0.0
        %328 = vst [vmem:[%s278] sm:$0xff] %v326
        %329 = vst [vmem:[%s278 + $0x8] sm:$0xff] %v327
        %v330 = vld [vmem:[#allocation2] sm:$0xff]
        %v331 = vld [vmem:[#allocation2 + $0x8] sm:$0xff]
        %v332 = vld [vmem:[#allocation2 + $0x10] sm:$0xff]
        %v333 = vld [vmem:[#allocation2 + $0x18] sm:$0xff]
        %v334 = vld [vmem:[#allocation2 + $0x20] sm:$0xff]
        %v335 = vld [vmem:[#allocation2 + $0x28] sm:$0xff]
        %v336 = vld [vmem:[#allocation2 + $0x30] sm:$0xff]
        %v337 = vld [vmem:[#allocation2 + $0x38] sm:$0xff]
        %v338 = vld [vmem:[#allocation2 + $0x40] sm:$0xff]
        %v339 = vld [vmem:[#allocation2 + $0x48] sm:$0xff]
        %v340 = vld [vmem:[#allocation2 + $0x50] sm:$0xff]
        %v341 = vld [vmem:[#allocation2 + $0x58] sm:$0xff]
        %v342 = vld [vmem:[#allocation2 + $0x60] sm:$0xff]
        %v343 = vld [vmem:[#allocation2 + $0x68] sm:$0xff]
        %v344 = vld [vmem:[#allocation2 + $0x70] sm:$0xff]
        %v345 = vld [vmem:[#allocation2 + $0x78] sm:$0xff]
        %v346 = vld [vmem:[%s4] sm:$0x1]
        %v348 = vperm.slane %v346, 0
        %350 = vmatpush.msra.mxu0 %v345
        %351 = vmatpush.msra.mxu0 %v344
        %352 = vmatpush.msra.mxu0 %v343
        %353 = vmatpush.msra.mxu0 %v342
        %354 = vmatpush.msra.mxu0 %v341
        %355 = vmatpush.msra.mxu0 %v340
        %356 = vmatpush.msra.mxu0 %v339
        %357 = vmatpush.msra.mxu0 %v338
        %358 = vmatpush.msra.mxu0 %v337
        %359 = vmatpush.msra.mxu0 %v336
        %360 = vmatpush.msra.mxu0 %v335
        %361 = vmatpush.msra.mxu0 %v334
        %362 = vmatpush.msra.mxu0 %v333
        %363 = vmatpush.msra.mxu0 %v332
        %364 = vmatpush.msra.mxu0 %v331
        %365 = vmatpush.msra.mxu0 %v330
        %366 = vmatmul.f32.gmra.mxu0 %v326
        %v367 = vpop.f32.mrf.mxu0
        %v368 = vadd.f32 %v348, %v367
        %369 = vmatmul.f32.gmra.mxu0 %v327
        %v370 = vpop.f32.mrf.mxu0
        %v371 = vadd.f32 %v348, %v370
        %372 = vdwg.mxu0
        %v373 = vlaneseq
        %v374 = vand.u32 %v373, 127
        %vm375 = vcmp.lt.s32.totalorder %v374, 8
        %v376 = vtanh.pop %v368
        %v377 = vtanh.pop %v371
        %v378 = vsel %vm375, %v376, %v368
        %v379 = vsel %vm375, %v377, %v371
        %380 = vst [vmem:[%s284] sm:$0xff] %v378
        %381 = vst [vmem:[%s284 + $0x8] sm:$0xff] %v379
        %s382 = smul.u32 2, %s19
        %p383 = scmp.lt.s32.totalorder %s382, 3
        %s384 = scalar_select %p383, %s382, 3
        %s385 = smul.addr %s384, 8
        %s386 = scalar_lea.vmem %s5, %s385
        %s387 = smul.u32 2, %s19
        %p388 = scmp.lt.s32.totalorder %s387, 3
        %s389 = scalar_select %p388, %s387, 3
        %s390 = smul.addr %s389, 8
        %s391 = scalar_lea.vmem %s6, %s390
        // Predicated region
        $region45: #{actor_critic_forward.1} parent=39 // pred_check
          %p392 = pneg %p147
        $region46: #{actor_critic_forward.1} parent=39 // pred_check_branch
          %394 = sbr.rel (%p392) target = $region48
        $region47: #{actor_critic_forward.1} parent=39 // pred_region
          %s395 = smul.u32 2, %s19
        $region48: #{actor_critic_forward.1} parent=39 // pred_fallthru
          _
        // Predicated region
        $region49: #{actor_critic_forward.1} parent=39 // pred_check
          %p396 = pneg %p173
        $region50: #{actor_critic_forward.1} parent=39 // pred_check_branch
          %398 = sbr.rel (%p396) target = $region52
        $region51: #{actor_critic_forward.1} parent=39 // pred_region
          %s399 = smul.u32 2, %s19
        $region52: #{actor_critic_forward.1} parent=39 // pred_fallthru
          _
      $region40: #{actor_critic_forward.1} parent=5 // pred_fallthru
        _
      %p400 = scmp.le.s32.totalorder 2, %s14
      // Predicated region
      $region53: #{actor_critic_forward.1} parent=5 // pred_check
        %p401 = pneg %p400
      $region54: #{actor_critic_forward.1} parent=5 // pred_check_branch
        %403 = sbr.rel (%p401) target = $region56
      $region55: #{actor_critic_forward.1} parent=5 // pred_region
        %s404 = ssub.s32 %s14, 2
        // Predicated region
        $region57: #{actor_critic_forward.1} parent=55 // pred_check
          %p405 = pneg %p153
        $region58: #{actor_critic_forward.1} parent=55 // pred_check_branch
          %407 = sbr.rel (%p405) target = $region60
        $region59: #{actor_critic_forward.1} parent=55 // pred_region
          %s408 = smul.u32 2, %s20
          %p409 = scmp.lt.s32.totalorder %s408, 3
          %s410 = scalar_select %p409, %s408, 3
          %s411 = smul.addr %s410, 8
          %s412 = scalar_lea.vmem %s5, %s411
        $region60: #{actor_critic_forward.1} parent=55 // pred_fallthru
          _
        // Predicated region
        $region61: #{actor_critic_forward.1} parent=55 // pred_check
          %p413 = pneg %p179
        $region62: #{actor_critic_forward.1} parent=55 // pred_check_branch
          %415 = sbr.rel (%p413) target = $region64
        $region63: #{actor_critic_forward.1} parent=55 // pred_region
          %s416 = smul.u32 2, %s20
          %p417 = scmp.lt.s32.totalorder %s416, 3
          %s418 = scalar_select %p417, %s416, 3
          %s419 = smul.addr %s418, 8
          %s420 = scalar_lea.vmem %s6, %s419
        $region64: #{actor_critic_forward.1} parent=55 // pred_fallthru
          _
      $region56: #{actor_critic_forward.1} parent=5 // pred_fallthru
        _
    $region6: #{actor_critic_forward.1} parent=1 // loop_footer
      %s18 = sadd.s32 1, %s14
    $region7: #{actor_critic_forward.1} parent=1 // loop_footer_branch
      %13 = sbr.rel target = $region3
    $region8: #{actor_critic_forward.1} parent=1 // loop_exit
      _
    %421 = vsyncpa [#allocation3], 1
    %s422 = scalar_lea.sflag [#allocation3], 1
    %423 = vsyncpa %s422, 1

</llo_original>
